<compile_context>
chip_gen: v5e
topology: v5e:2x2
jax: 0.10.0
libtpu: 0.0.40
codegen_flags: <defaults>
</compile_context>

<pallas_src>
import jax
import jax.numpy as jnp
from jax.experimental import pallas as pl
from jax.experimental.pallas import tpu as pltpu


def _round_up(x, m):
    return (x + m - 1) // m * m


# --------------------------------------------------------------------------- #
# Kernels
# --------------------------------------------------------------------------- #
def _mlp_kernel(x_ref, w_ref, b_ref, o_ref):
    """Full-K tile:  o = tanh(x @ W + b), f32 accumulation on the MXU.

    x_ref: (tb, tk)  activations (compute dtype)
    w_ref: (tk, tn)  weight tile in [in, out] layout (compute dtype)
    b_ref: (1, tn)   bias tile (f32)
    o_ref: (tb, tn)  output tile
    """
    acc = jnp.dot(x_ref[...], w_ref[...], preferred_element_type=jnp.float32)
    o_ref[...] = jnp.tanh(acc + b_ref[...]).astype(o_ref.dtype)


def _mlp_kernel_kacc(x_ref, w_ref, b_ref, o_ref, acc_ref):
    """K-tiled variant (very large hidden sizes): f32 accumulator + pl.when."""
    k = pl.program_id(2)

    @pl.when(k == 0)
    def _():
        acc_ref[...] = jnp.zeros_like(acc_ref)

    acc_ref[...] += jnp.dot(x_ref[...], w_ref[...],
                            preferred_element_type=jnp.float32)

    @pl.when(k == pl.num_programs(2) - 1)
    def _():
        o_ref[...] = jnp.tanh(acc_ref[...] + b_ref[...]).astype(o_ref.dtype)


# --------------------------------------------------------------------------- #
# Planning helpers
# --------------------------------------------------------------------------- #
def _vmem_capacity_bytes():
    try:
        return int(pltpu.get_tpu_info().vmem_capacity_bytes)
    except Exception:
        return 64 << 20          # conservative (v7x-sized) fallback


def _default_vmem_budget():
    cap = _vmem_capacity_bytes()
    # ~48 MiB on 128 MiB chips (v5e/v6e), ~28 MiB on 64 MiB chips (v7x).
    return min(48 << 20, max(16 << 20, int(cap * 0.45)))


def _tile_plan(B, h_pad, n_pad, in_bytes, out_bytes, vmem_budget_bytes):
    """Pick (tile_b, tile_n, tile_k) that fit the VMEM budget."""
    sub = max(8, 32 // in_bytes)          # sublane packing: f32->8, bf16->16, fp8->32

    # K-tile candidates: multiples of 128 that divide h_pad exactly, so the
    # contraction never sees a ragged (garbage-padded) block.
    m = h_pad // 128
    k_cands = [128 * d for d in range(m, 0, -1) if m % d == 0]

    tile_n = min(512, n_pad)
    tile_b = B if B <= 256 else 256
    ki = 0
    tile_k = k_cands[ki]

    def fits():
        acc = tile_b * tile_n * 4 if tile_k < h_pad else 0
        return (2 * (tile_b * tile_k + tile_k * tile_n) * in_bytes   # x + W (dbl buf)
                + 2 * (tile_n * 4 + tile_b * tile_n * out_bytes)     # bias + out
                + acc) <= vmem_budget_bytes

    # 1) Shrink K first (keeps output tiles / MXU utilisation large)  [v7x]
    while not fits() and ki + 1 < len(k_cands) and k_cands[ki + 1] >= 512:
        ki += 1
        tile_k = k_cands[ki]
    # 2) Then N, floor 256.
    while not fits() and tile_n > 256:
        tile_n = max(256, _round_up(tile_n // 2, 128))
    # 3) Then B, floor 128 (keeps the f32 epilogue hidden on v5e's single vst).
    while not fits() and tile_b > 128:
        tile_b = max(128, _round_up(tile_b // 2, sub))
    # 4) K all the way down to 128.
    while not fits() and ki + 1 < len(k_cands):
        ki += 1
        tile_k = k_cands[ki]
    # 5) Last resort.
    while not fits() and tile_n > 128:
        tile_n = max(128, _round_up(tile_n // 2, 128))
    while not fits() and tile_b > sub:
        tile_b = max(sub, _round_up(tile_b // 2, sub))

    # Guarantee >=2 steps on the parallel axes so both v7x TensorCores get work
    # and the pipeline has something to overlap (the tiny-CLS case).
    n_tiles = pl.cdiv(n_pad, tile_n)
    b_tiles = pl.cdiv(B, tile_b)
    if n_tiles * b_tiles == 1 and n_pad >= 256:
        tile_n = max(128, _round_up(n_pad // 2, 128))

    return tile_b, tile_n, tile_k


# --------------------------------------------------------------------------- #
# Public API
# --------------------------------------------------------------------------- #
def prepare_mlp_params(weight, bias, *, compute_dtype=jnp.bfloat16):
    """One-time weight preparation. Do this OUTSIDE the hot path and cache it.

    weight: [out, in] (PyTorch nn.Linear layout); bias: [out].
    Returns (w_kn, b_1n): weight in [in_pad, out_pad] layout (compute dtype,
    zero-padded to multiples of 128 on both dims) and f32 bias (1, out_pad).
    """
    H_out, H_in = weight.shape
    n_pad = _round_up(H_out, 128)
    h_pad = _round_up(H_in, 128)
    w_kn = jnp.pad(weight.T, ((0, h_pad - H_in), (0, n_pad - H_out)))
    w_kn = w_kn.astype(compute_dtype)
    b_1n = jnp.pad(bias.astype(jnp.float32), (0, n_pad - H_out)).reshape(1, n_pad)
    return w_kn, b_1n


def mlp_layer_prepared(features, w_kn, b_1n, *, out_features=None,
                       out_dtype=None, vmem_budget_bytes=None):
    """tanh(features @ W + b) with a pre-prepared [in, out] weight."""
    B, H = features.shape
    h_pad, n_pad = w_kn.shape
    assert h_pad == _round_up(H, 128), "prepared weight does not match features"
    compute_dtype = w_kn.dtype
    out_dtype = out_dtype or features.dtype
    out_features = n_pad if out_features is None else out_features

    if vmem_budget_bytes is None:
        vmem_budget_bytes = _default_vmem_budget()

    in_bytes = jnp.dtype(compute_dtype).itemsize
    out_bytes = jnp.dtype(out_dtype).itemsize
    tile_b, tile_n, tile_k = _tile_plan(B, h_pad, n_pad, in_bytes, out_bytes,
                                        vmem_budget_bytes)
    n_tiles = pl.cdiv(n_pad, tile_n)
    b_tiles = pl.cdiv(B, tile_b)
    k_tiles = h_pad // tile_k
    grid = (n_tiles, b_tiles, k_tiles)

    # Activations: cast + zero-pad the contraction dim (cheap, B x H only).
    x = features.astype(compute_dtype)
    if h_pad != H:
        x = jnp.pad(x, ((0, 0), (0, h_pad - H)))

    # Grid order: N outer, batch inner, K last ("arbitrary").  With k_tiles == 1
    # the weight block index is constant across the batch sweep -> weight is
    # read from HBM exactly once per N tile.
    in_specs = [
        pl.BlockSpec((tile_b, tile_k), lambda j, i, k: (i, k)),   # activations
        pl.BlockSpec((tile_k, tile_n), lambda j, i, k: (k, j)),   # weight [in, out]
        pl.BlockSpec((1, tile_n), lambda j, i, k: (0, j)),        # bias
    ]
    out_spec = pl.BlockSpec((tile_b, tile_n), lambda j, i, k: (i, j))

    if k_tiles == 1:
        kernel = _mlp_kernel
        scratch = []
    else:
        kernel = _mlp_kernel_kacc
        scratch = [pltpu.VMEM((tile_b, tile_n), jnp.float32)]

    # Advisory cost reflecting actual traffic under this grid order.
    w_reads = 1 if k_tiles == 1 else b_tiles
    cost = pl.CostEstimate(
        flops=2 * B * h_pad * n_pad,
        transcendentals=B * n_pad,
        bytes_accessed=(n_pad * h_pad * in_bytes * w_reads
                        + n_tiles * B * h_pad * in_bytes
                        + B * n_pad * out_bytes
                        + n_pad * 4),
    )

    out = pl.pallas_call(
        kernel,
        out_shape=jax.ShapeDtypeStruct((B, n_pad), out_dtype),
        grid_spec=pltpu.PrefetchScalarGridSpec(
            num_scalar_prefetch=0,
            grid=grid,
            in_specs=in_specs,
            out_specs=out_spec,
            scratch_shapes=scratch,
        ),
        compiler_params=pltpu.CompilerParams(
            dimension_semantics=("parallel", "parallel", "arbitrary"),
            vmem_limit_bytes=int(vmem_budget_bytes) + (8 << 20),
        ),
        cost_estimate=cost,
    )(x, w_kn, b_1n)

    return out[:, :out_features] if out_features != n_pad else out


def mlp_layer(features, weight, bias, *, compute_dtype=jnp.bfloat16, **kwargs):
    """Convenience wrapper matching MLPLayer.forward: tanh(features @ weight.T + bias).

    NOTE: re-prepares (transpose/pad/cast) the weight each call; in real use
    cache prepare_mlp_params() and call mlp_layer_prepared() in the hot path.
    """
    w_kn, b_1n = prepare_mlp_params(weight, bias, compute_dtype=compute_dtype)
    return mlp_layer_prepared(features, w_kn, b_1n,
                              out_features=weight.shape[0], **kwargs)


# --------------------------------------------------------------------------- #
# Self-test
# --------------------------------------------------------------------------- #
if __name__ == "__main__":
    key = jax.random.PRNGKey(0)
    k_x, k_w, k_b = jax.random.split(key, 3)

    # Small CLS batch and hidden size, consistent with the module.
    B, H = 16, 256
    x = jax.random.normal(k_x, (B, H), dtype=jnp.float32)
    w = jax.random.normal(k_w, (H, H), dtype=jnp.float32) * 0.02   # PyTorch [out, in]
    b = jax.random.normal(k_b, (H,), dtype=jnp.float32) * 0.02

    ref = jnp.tanh(x @ w.T + b)

    # bf16-compute path: weight prepared ONCE, applied via the prepared entry point.
    w_p, b_p = prepare_mlp_params(w, b, compute_dtype=jnp.bfloat16)
    out_bf16 = mlp_layer_prepared(x, w_p, b_p, out_features=H)
    jax.block_until_ready(out_bf16)
    assert out_bf16.shape == (B, H)
    assert jnp.allclose(out_bf16, ref, atol=2e-2, rtol=2e-2)

    # f32-compute path through the convenience wrapper (strict tolerance).
    out_f32 = mlp_layer(x, w, b, compute_dtype=jnp.float32)
    jax.block_until_ready(out_f32)
    assert jnp.allclose(out_f32, ref, atol=1e-5, rtol=1e-5)

    # Multi-batch-tile path (B > tile_b, with a partial last batch block).
    B3 = 272
    x3 = jax.random.normal(k_x, (B3, H), dtype=jnp.float32)
    out3 = mlp_layer(x3, w, b, compute_dtype=jnp.float32)
    jax.block_until_ready(out3)
    ref3 = jnp.tanh(x3 @ w.T + b)
    assert out3.shape == (B3, H)
    assert jnp.allclose(out3, ref3, atol=1e-5, rtol=1e-5)

    # Non-multiple-of-128 hidden size exercises padding of BOTH the contraction
    # (K) and output-feature (N) dims.
    H2 = 192
    x2 = jax.random.normal(k_x, (4, H2), dtype=jnp.float32)
    w2 = jax.random.normal(k_w, (H2, H2), dtype=jnp.float32) * 0.02
    b2 = jax.random.normal(k_b, (H2,), dtype=jnp.float32) * 0.02
    out2 = mlp_layer(x2, w2, b2, compute_dtype=jnp.float32)
    jax.block_until_ready(out2)
    ref2 = jnp.tanh(x2 @ w2.T + b2)
    assert out2.shape == (4, H2)
    assert jnp.allclose(out2, ref2, atol=1e-5, rtol=1e-5)

    print("KERNEL_OK")
</pallas_src>

<mosaic_0001>
module attributes {stable_mosaic.version = 11 : i64} {
  func.func @_mlp_kernel(%arg0: i32, %arg1: i32, %arg2: i32, %arg3: memref<16x256xbf16, #tpu.memory_space<vmem>>, %arg4: memref<256x128xbf16, #tpu.memory_space<vmem>>, %arg5: memref<1x128xf32, #tpu.memory_space<vmem>>, %arg6: memref<16x128xf32, #tpu.memory_space<vmem>>) attributes {dimension_semantics = [#tpu.dimension_semantics<parallel>, #tpu.dimension_semantics<parallel>, #tpu.dimension_semantics<arbitrary>], iteration_bounds = array<i64: 2, 1, 1>, scalar_prefetch = 0 : i64, scratch_operands = 0 : i64, tpu.core_type = #tpu.core_type<tc>, window_params = [{transform_indices = @transform_0, window_bounds = array<i64: 16, 256>}, {transform_indices = @transform_1, window_bounds = array<i64: 256, 128>}, {transform_indices = @transform_2, window_bounds = array<i64: 1, 128>}, {transform_indices = @transform_3, window_bounds = array<i64: 16, 128>}]} {
    %c0 = arith.constant 0 : index
    %c0_0 = arith.constant 0 : index
    %0 = vector.load %arg3[%c0, %c0_0] : memref<16x256xbf16, #tpu.memory_space<vmem>>, vector<16x256xbf16>
    %c0_1 = arith.constant 0 : index
    %c0_2 = arith.constant 0 : index
    %1 = vector.load %arg4[%c0_1, %c0_2] : memref<256x128xbf16, #tpu.memory_space<vmem>>, vector<256x128xbf16>
    %cst = arith.constant dense<0.000000e+00> : vector<16x128xf32>
    %2 = tpu.matmul %0, %1, %cst {dimension_numbers = #tpu.dot_dimension_numbers<[1], [0], [0], [1], [0, 0, 1, 1], [], []>} : vector<16x256xbf16>, vector<256x128xbf16>, vector<16x128xf32> -> vector<16x128xf32>
    %c0_3 = arith.constant 0 : index
    %c0_4 = arith.constant 0 : index
    %3 = vector.load %arg5[%c0_3, %c0_4] : memref<1x128xf32, #tpu.memory_space<vmem>>, vector<1x128xf32>
    %4 = vector.broadcast %3 : vector<1x128xf32> to vector<16x128xf32>
    %5 = arith.addf %2, %4 : vector<16x128xf32>
    %6 = math.tanh %5 : vector<16x128xf32>
    %c0_5 = arith.constant 0 : index
    %c0_6 = arith.constant 0 : index
    %7 = vector.load %arg6[%c0_5, %c0_6] : memref<16x128xf32, #tpu.memory_space<vmem>>, vector<16x128xf32>
    tpu.vector_store %arg6[%c0_5, %c0_6], %6 {strides = array<i32>} : memref<16x128xf32, #tpu.memory_space<vmem>>, vector<16x128xf32>,
    return
  }
  func.func @transform_0(%arg0: i32, %arg1: i32, %arg2: i32) -> (i32, i32) {
    %c0_i32 = arith.constant 0 : i32
    return %arg1, %arg2 : i32, i32
  }
  func.func @transform_1(%arg0: i32, %arg1: i32, %arg2: i32) -> (i32, i32) {
    %c0_i32 = arith.constant 0 : i32
    return %arg2, %arg0 : i32, i32
  }
  func.func @transform_2(%arg0: i32, %arg1: i32, %arg2: i32) -> (i32, i32) {
    %c0_i32 = arith.constant 0 : i32
    %c0_i32_0 = arith.constant 0 : i32
    return %c0_i32, %arg0 : i32, i32
  }
  func.func @transform_3(%arg0: i32, %arg1: i32, %arg2: i32) -> (i32, i32) {
    %c0_i32 = arith.constant 0 : i32
    return %arg1, %arg0 : i32, i32
  }
}

</mosaic_0001>

<llo_original>
// kernel: tpu_custom_call.1
$region0: #{tpu_custom_call.1}
  #allocation0 [shape = 'u32[]', space=smem, size = 0x4, offset = 0x4, fixed_abs, tag = 'smem constant byte address 0x4 - core index']
  #allocation1 [shape = 'u32[72,128]{1,0:T(1,128)}', space=vmem, size = 0x9000, scoped, tag = 'internal scratch']
  %s0 = inlined_call_operand.hbm [shape: bf16[16,256], index: 0, kind: input, shape index: {}]
  %s1 = inlined_call_operand.hbm [shape: bf16[256,256], index: 1, kind: input, shape index: {}]
  %s2 = inlined_call_operand.hbm [shape: f32[1,256], index: 2, kind: input, shape index: {}]
  %s3 = inlined_call_operand.hbm [shape: f32[16,256], index: 3, kind: output, shape index: {}]
  %s4 = sld [smem:[#allocation0]]
  $region57: #{tpu_custom_call.1} parent=0
    _
  %s6 = ssub.s32 1, %s4
  %s7 = scalar_select 0, %s6, %s4
  $region1: #{tpu_custom_call.1} parent=0
    #allocation2 [shape = 'u8[8192]{0}', space=vmem, size = 0x2000, scoped, tag = 'input window, operand 0, single buffered']
    #allocation3 [shape = 's32[2]{0}', space=sflag, size = 0x8, scoped, tag = 'scoped memory for tpu_custom_call.1']
    #allocation4 [shape = 's32[2]{0}', space=sflag, size = 0x8, scoped, tag = 'scoped memory for tpu_custom_call.1']
    #allocation5 [shape = 'u8[131072]{0}', space=vmem, size = 0x20000, scoped, tag = 'input window, operand 1']
    #allocation6 [shape = 's32[2]{0}', space=sflag, size = 0x8, scoped, tag = 'scoped memory for tpu_custom_call.1']
    #allocation7 [shape = 'u8[1024]{0}', space=vmem, size = 0x400, scoped, tag = 'input window, operand 2']
    #allocation8 [shape = 'u8[16384]{0}', space=vmem, size = 0x4000, scoped, tag = 'output window, operand 0']
    %8 = vsyncpa [#allocation3], 0
    %9 = vsyncpa [#allocation6], 0
    %s10 = scalar_lea.sflag [#allocation6], 1
    %11 = vsyncpa %s10, 0
    %12 = vsyncpa [#allocation4], 0
    %s13 = scalar_lea.sflag [#allocation4], 1
    %14 = vsyncpa %s13, 0
    loop: start=0, step=1, limit=4
    $region2: #{tpu_custom_call.1} parent=1 // loop_pre_header
      _
    $region3: #{tpu_custom_call.1} parent=1 // loop_header
      %s16 = sphi 0, %s20
      %p17 = scmp.ge.s32.totalorder %s16, 4
      %s23 = sphi 0, %s42
      %s24 = sphi 0, %s38
      %s25 = sphi 0, %s34
      %s26 = sphi 0, %s23
      %s27 = sphi 0, %s24
      %s28 = sphi 0, %s25
      %s29 = sphi 0, %s26
      %s30 = sphi 0, %s27
      %s31 = sphi 0, %s28
      %s47 = sphi 0, %s49
      %s50 = sphi 0, %s47
      %s51 = sphi 0, %s50
      %s67 = sphi 0, %s51
      %s75 = sphi 0, %s77
      %s78 = sphi 0, %s75
      %s79 = sphi 0, %s78
      %s95 = sphi 0, %s79
      %s101 = sphi 0, %s103
      %s104 = sphi 0, %s101
      %s105 = sphi 0, %s104
      %s121 = sphi 0, %s105
      %s129 = sphi 0, %s131
      %s132 = sphi 0, %s129
      %s133 = sphi 0, %s132
      %s149 = sphi 0, %s133
    $region4: #{tpu_custom_call.1} parent=1 // loop_header_branch
      %19 = sbr.rel (%p17) target = $region8
    $region5: #{tpu_custom_call.1} parent=1 // loop_body
      %s21 = ssub.s32 %s16, 1
      %s22 = ssub.s32 %s16, 2
      %s32 = sadd.s32 1, %s25
      %p33 = scmp.ge.s32.totalorder %s32, 1
      %s34 = scalar_select %p33, 0, %s32
      %s35 = sadd.s32 1, %s24
      %s36 = scalar_select %p33, %s35, %s24
      %p37 = scmp.ge.s32.totalorder %s36, 1
      %s38 = scalar_select %p37, 0, %s36
      %s39 = sadd.s32 1, %s23
      %s40 = scalar_select %p37, %s39, %s23
      %p41 = scmp.ge.s32.totalorder %s40, 2
      %s42 = scalar_select %p41, 0, %s40
      %s43 = ssub.s32 %s24, %s38
      %s44 = ssub.s32 %s25, %s34
      %s45 = sor.u32 %s43, %s44
      %p46 = scmp.eq.s32.totalorder %s45, 0
      %s48 = sadd.s32 %s47, 1
      %s49 = scalar_select %p46, %s47, %s48
      %p52 = pneg %p46
      %p53 = scmp.eq.s32.totalorder %s16, 1
      %p54 = por %p52, %p53
      %p55 = scmp.ne.s32.totalorder %s47, %s50
      %p56 = scmp.eq.s32.totalorder %s16, 0
      %p57 = por %p55, %p56
      %p58 = scmp.ne.s32.totalorder %s47, %s50
      %p59 = scmp.eq.s32.totalorder %s21, 1
      %p60 = por %p58, %p59
      %p61 = scmp.ne.s32.totalorder %s50, %s51
      %p62 = scmp.eq.s32.totalorder %s21, 0
      %p63 = por %p61, %p62
      %p64 = scmp.ne.s32.totalorder %s50, %s51
      %p65 = scmp.eq.s32.totalorder %s22, 1
      %p66 = por %p64, %p65
      %p68 = scmp.ne.s32.totalorder %s51, %s67
      %p69 = scmp.eq.s32.totalorder %s22, 0
      %p70 = por %p68, %p69
      %s71 = ssub.s32 %s25, %s34
      %s72 = ssub.s32 %s23, %s42
      %s73 = sor.u32 %s71, %s72
      %p74 = scmp.eq.s32.totalorder %s73, 0
      %s76 = sadd.s32 %s75, 1
      %s77 = scalar_select %p74, %s75, %s76
      %p80 = pneg %p74
      %p81 = scmp.eq.s32.totalorder %s16, 1
      %p82 = por %p80, %p81
      %p83 = scmp.ne.s32.totalorder %s75, %s78
      %p84 = scmp.eq.s32.totalorder %s16, 0
      %p85 = por %p83, %p84
      %p86 = scmp.ne.s32.totalorder %s75, %s78
      %p87 = scmp.eq.s32.totalorder %s21, 1
      %p88 = por %p86, %p87
      %p89 = scmp.ne.s32.totalorder %s78, %s79
      %p90 = scmp.eq.s32.totalorder %s21, 0
      %p91 = por %p89, %p90
      %p92 = scmp.ne.s32.totalorder %s78, %s79
      %p93 = scmp.eq.s32.totalorder %s22, 1
      %p94 = por %p92, %p93
      %p96 = scmp.ne.s32.totalorder %s79, %s95
      %p97 = scmp.eq.s32.totalorder %s22, 0
      %p98 = por %p96, %p97
      %s99 = ssub.s32 %s23, %s42
      %p100 = scmp.eq.s32.totalorder %s99, 0
      %s102 = sadd.s32 %s101, 1
      %s103 = scalar_select %p100, %s101, %s102
      %p106 = pneg %p100
      %p107 = scmp.eq.s32.totalorder %s16, 1
      %p108 = por %p106, %p107
      %p109 = scmp.ne.s32.totalorder %s101, %s104
      %p110 = scmp.eq.s32.totalorder %s16, 0
      %p111 = por %p109, %p110
      %p112 = scmp.ne.s32.totalorder %s101, %s104
      %p113 = scmp.eq.s32.totalorder %s21, 1
      %p114 = por %p112, %p113
      %p115 = scmp.ne.s32.totalorder %s104, %s105
      %p116 = scmp.eq.s32.totalorder %s21, 0
      %p117 = por %p115, %p116
      %p118 = scmp.ne.s32.totalorder %s104, %s105
      %p119 = scmp.eq.s32.totalorder %s22, 1
      %p120 = por %p118, %p119
      %p122 = scmp.ne.s32.totalorder %s105, %s121
      %p123 = scmp.eq.s32.totalorder %s22, 0
      %p124 = por %p122, %p123
      %s125 = ssub.s32 %s24, %s38
      %s126 = ssub.s32 %s23, %s42
      %s127 = sor.u32 %s125, %s126
      %p128 = scmp.eq.s32.totalorder %s127, 0
      %s130 = sadd.s32 %s129, 1
      %s131 = scalar_select %p128, %s129, %s130
      %p134 = pneg %p128
      %p135 = scmp.eq.s32.totalorder %s16, 1
      %p136 = por %p134, %p135
      %p137 = scmp.ne.s32.totalorder %s129, %s132
      %p138 = scmp.eq.s32.totalorder %s16, 0
      %p139 = por %p137, %p138
      %p140 = scmp.ne.s32.totalorder %s129, %s132
      %p141 = scmp.eq.s32.totalorder %s21, 1
      %p142 = por %p140, %p141
      %p143 = scmp.ne.s32.totalorder %s132, %s133
      %p144 = scmp.eq.s32.totalorder %s21, 0
      %p145 = por %p143, %p144
      %p146 = scmp.ne.s32.totalorder %s132, %s133
      %p147 = scmp.eq.s32.totalorder %s22, 1
      %p148 = por %p146, %p147
      %p150 = scmp.ne.s32.totalorder %s133, %s149
      %p151 = scmp.eq.s32.totalorder %s22, 0
      %p152 = por %p150, %p151
      %p153 = scmp.le.s32.totalorder 1, %s16
      %p154 = scmp.lt.s32.totalorder %s16, 3
      %p155 = pnand %p153, %p154
      %p156 = pneg %p155
      // Predicated region
      $region9: #{tpu_custom_call.1} parent=5 // pred_check
        _
      $region10: #{tpu_custom_call.1} parent=5 // pred_check_branch
        %158 = sbr.rel (%p155) target = $region12
      $region11: #{tpu_custom_call.1} parent=5 // pred_region
        %s159 = ssub.s32 %s16, 1
        // Predicated region
        $region13: #{tpu_custom_call.1} parent=11 // pred_check
          %p160 = pneg %p63
        $region14: #{tpu_custom_call.1} parent=11 // pred_check_branch
          %162 = sbr.rel (%p160) target = $region16
        $region15: #{tpu_custom_call.1} parent=11 // pred_region
          %s163 = smul.u32 2, %s27
          %s164 = smul.u32 2, %s28
          %166 = vsyncadd [#allocation3], 0
          %s167 = smul.addr %s163, 2
          %s168 = sadd.s32 %s164, %s167
          %s169 = smul.addr %s168, 4
          %s170 = scalar_lea.hbm %s0, %s169
          %s171 = sshll.u32 %s170, 4
          %s172 = int_to_ptr.hbm [resolvable:$true] %s171
          %s173 = sshll.u32 [#allocation2], 4
          %s174 = int_to_ptr.vmem [resolvable:$true] %s173
          %179 = dma.hbm_to_vmem [thread:$0]  %s172, 256, %s174, [#allocation3], 128, 128, 8
        $region16: #{tpu_custom_call.1} parent=11 // pred_fallthru
          _
      $region12: #{tpu_custom_call.1} parent=5 // pred_fallthru
        _
      %p180 = scmp.lt.s32.totalorder %s16, 2
      // Predicated region
      $region17: #{tpu_custom_call.1} parent=5 // pred_check
        %p181 = pneg %p180
      $region18: #{tpu_custom_call.1} parent=5 // pred_check_branch
        %183 = sbr.rel (%p181) target = $region20
      $region19: #{tpu_custom_call.1} parent=5 // pred_region
        // Predicated region
        $region21: #{tpu_custom_call.1} parent=19 // pred_check
          %p184 = pneg %p85
        $region22: #{tpu_custom_call.1} parent=19 // pred_check_branch
          %186 = sbr.rel (%p184) target = $region24
        $region23: #{tpu_custom_call.1} parent=19 // pred_region
          %s187 = sand.u32 %s16, 1
          %s188 = scalar_lea.sflag [#allocation6], %s187
          %s189 = sand.u32 %s75, 1
          %s190 = smul.addr %s189, 128
          %s191 = scalar_lea.vmem [#allocation5], %s190
          %s192 = smul.u32 32, %s25
          %194 = vsyncadd %s188, 0
          %s195 = smul.addr %s192, 2
          %s196 = sadd.s32 %s23, %s195
          %s197 = smul.addr %s196, 4
          %s198 = scalar_lea.hbm %s1, %s197
          %s199 = sshll.u32 %s198, 4
          %s200 = int_to_ptr.hbm [resolvable:$true] %s199
          %s201 = sshll.u32 %s191, 4
          %s202 = int_to_ptr.vmem [resolvable:$true] %s201
          %207 = dma.hbm_to_vmem [thread:$0]  %s200, 2048, %s202, %s188, 128, 64, 4
        $region24: #{tpu_custom_call.1} parent=19 // pred_fallthru
          _
        // Predicated region
        $region25: #{tpu_custom_call.1} parent=19 // pred_check
          %p208 = pneg %p111
        $region26: #{tpu_custom_call.1} parent=19 // pred_check_branch
          %210 = sbr.rel (%p208) target = $region28
        $region27: #{tpu_custom_call.1} parent=19 // pred_region
          %s211 = sand.u32 %s16, 1
          %s212 = scalar_lea.sflag [#allocation6], %s211
          %s213 = sand.u32 %s101, 1
          %s214 = scalar_lea.vmem [#allocation7], %s213
          %216 = vsyncadd %s212, 0
          %s217 = scalar_lea.hbm %s2, %s23
          %s219 = sshll.u32 %s217, 4
          %s220 = int_to_ptr.hbm [resolvable:$true] %s219
          %s221 = sshll.u32 %s214, 4
          %s222 = int_to_ptr.vmem [resolvable:$true] %s221
          %224 = dma.hbm_to_vmem [thread:$0]  %s220, 16, %s222, %s212
        $region28: #{tpu_custom_call.1} parent=19 // pred_fallthru
          _
      $region20: #{tpu_custom_call.1} parent=5 // pred_fallthru
        _
      %p225 = scmp.le.s32.totalorder 1, %s16
      %p226 = scmp.lt.s32.totalorder %s16, 3
      %p227 = pnand %p225, %p226
      %p228 = pneg %p227
      // Predicated region
      $region29: #{tpu_custom_call.1} parent=5 // pred_check
        _
      $region30: #{tpu_custom_call.1} parent=5 // pred_check_branch
        %230 = sbr.rel (%p227) target = $region32
      $region31: #{tpu_custom_call.1} parent=5 // pred_region
        %s231 = ssub.s32 %s16, 1
        // Predicated region
        $region33: #{tpu_custom_call.1} parent=31 // pred_check
          %p232 = pneg %p63
        $region34: #{tpu_custom_call.1} parent=31 // pred_check_branch
          %234 = sbr.rel (%p232) target = $region36
        $region35: #{tpu_custom_call.1} parent=31 // pred_region
          %236 = dma.done [#allocation3], 256
        $region36: #{tpu_custom_call.1} parent=31 // pred_fallthru
          _
        %s237 = sand.u32 %s21, 1
        %s238 = scalar_lea.sflag [#allocation6], %s237
        %s239 = sand.u32 %s78, 1
        %s240 = smul.addr %s239, 128
        %s241 = scalar_lea.vmem [#allocation5], %s240
        // Predicated region
        $region37: #{tpu_custom_call.1} parent=31 // pred_check
          %p242 = pneg %p91
        $region38: #{tpu_custom_call.1} parent=31 // pred_check_branch
          %244 = sbr.rel (%p242) target = $region40
        $region39: #{tpu_custom_call.1} parent=31 // pred_region
          %246 = dma.done %s238, 2048
        $region40: #{tpu_custom_call.1} parent=31 // pred_fallthru
          _
        %s247 = sand.u32 %s21, 1
        %s248 = scalar_lea.sflag [#allocation6], %s247
        %s249 = sand.u32 %s104, 1
        %s250 = scalar_lea.vmem [#allocation7], %s249
        // Predicated region
        $region41: #{tpu_custom_call.1} parent=31 // pred_check
          %p251 = pneg %p117
        $region42: #{tpu_custom_call.1} parent=31 // pred_check_branch
          %253 = sbr.rel (%p251) target = $region44
        $region43: #{tpu_custom_call.1} parent=31 // pred_region
          %255 = dma.done %s248, 16
        $region44: #{tpu_custom_call.1} parent=31 // pred_fallthru
          _
        %p256 = pneg %p63
        %p257 = pneg %p60
        %s258 = sand.u32 %s21, 1
        %s259 = scalar_lea.sflag [#allocation6], %s258
        %s260 = sand.u32 %s78, 1
        %s261 = smul.addr %s260, 128
        %s262 = scalar_lea.vmem [#allocation5], %s261
        %p263 = pneg %p91
        %p264 = pneg %p88
        %s265 = sand.u32 %s21, 1
        %s266 = scalar_lea.sflag [#allocation6], %s265
        %s267 = sand.u32 %s104, 1
        %s268 = scalar_lea.vmem [#allocation7], %s267
        %p269 = pneg %p117
        %p270 = pneg %p114
        %p271 = pneg %p145
        %p272 = pneg %p142
        %s273 = sand.u32 %s132, 1
        %s274 = scalar_lea.sflag [#allocation4], %s273
        %s275 = sand.u32 %s132, 1
        %s276 = smul.addr %s275, 16
        %s277 = scalar_lea.vmem [#allocation8], %s276
        %s278 = smul.u32 2, %s27
        %s279 = smul.u32 2, %s28
        %s280 = smul.u32 32, %s28
        %s281 = smul.u32 2, %s27
        %v282 = vld [vmem:[#allocation2] sm:$0xff]
        %v283 = vld [vmem:[#allocation2 + $0x8] sm:$0xff]
        %v284 = vld [vmem:[%s241] sm:$0xf]
        %v285 = vld [vmem:[%s241 + $0x4] sm:$0xf]
        %v286 = vld [vmem:[%s241 + $0x8] sm:$0xf]
        %v287 = vld [vmem:[%s241 + $0xc] sm:$0xf]
        %v288 = vld [vmem:[%s241 + $0x10] sm:$0xf]
        %v289 = vld [vmem:[%s241 + $0x14] sm:$0xf]
        %v290 = vld [vmem:[%s241 + $0x18] sm:$0xf]
        %v291 = vld [vmem:[%s241 + $0x1c] sm:$0xf]
        %v292 = vld [vmem:[%s241 + $0x20] sm:$0xf]
        %v293 = vld [vmem:[%s241 + $0x24] sm:$0xf]
        %v294 = vld [vmem:[%s241 + $0x28] sm:$0xf]
        %v295 = vld [vmem:[%s241 + $0x2c] sm:$0xf]
        %v296 = vld [vmem:[%s241 + $0x30] sm:$0xf]
        %v297 = vld [vmem:[%s241 + $0x34] sm:$0xf]
        %v298 = vld [vmem:[%s241 + $0x38] sm:$0xf]
        %v299 = vld [vmem:[%s241 + $0x3c] sm:$0xf]
        %v300 = vld [vmem:[%s241 + $0x40] sm:$0xf]
        %v301 = vld [vmem:[%s241 + $0x44] sm:$0xf]
        %v302 = vld [vmem:[%s241 + $0x48] sm:$0xf]
        %v303 = vld [vmem:[%s241 + $0x4c] sm:$0xf]
        %v304 = vld [vmem:[%s241 + $0x50] sm:$0xf]
        %v305 = vld [vmem:[%s241 + $0x54] sm:$0xf]
        %v306 = vld [vmem:[%s241 + $0x58] sm:$0xf]
        %v307 = vld [vmem:[%s241 + $0x5c] sm:$0xf]
        %v308 = vld [vmem:[%s241 + $0x60] sm:$0xf]
        %v309 = vld [vmem:[%s241 + $0x64] sm:$0xf]
        %v310 = vld [vmem:[%s241 + $0x68] sm:$0xf]
        %v311 = vld [vmem:[%s241 + $0x6c] sm:$0xf]
        %v312 = vld [vmem:[%s241 + $0x70] sm:$0xf]
        %v313 = vld [vmem:[%s241 + $0x74] sm:$0xf]
        %v314 = vld [vmem:[%s241 + $0x78] sm:$0xf]
        %v315 = vld [vmem:[%s241 + $0x7c] sm:$0xf]
        %v316 = vld [vmem:[%s250] sm:$0x1]
        %v318 = vperm.slane %v316, 0
        %v322 = vunpack.c.l.b16 %v282
        %v323 = vunpack.c.h.b16 %v282
        %v324 = vunpack.c.l.b16 %v283
        %v325 = vunpack.c.h.b16 %v283
        %v326 = vpack.c.b16 %v324, %v322
        %v327 = vpack.c.b16 %v325, %v323
        %v362 = vunpack.c.l.b16 %v284
        %v363 = vunpack.c.l.b16 %v285
        %v364 = vunpack.c.l.b16 %v286
        %v365 = vunpack.c.l.b16 %v287
        %v366 = vunpack.c.l.b16 %v288
        %v367 = vunpack.c.l.b16 %v289
        %v368 = vunpack.c.l.b16 %v290
        %v369 = vunpack.c.l.b16 %v291
        %v370 = vunpack.c.l.b16 %v292
        %v371 = vunpack.c.l.b16 %v293
        %v372 = vunpack.c.l.b16 %v294
        %v373 = vunpack.c.l.b16 %v295
        %v374 = vunpack.c.l.b16 %v296
        %v375 = vunpack.c.l.b16 %v297
        %v376 = vunpack.c.l.b16 %v298
        %v377 = vunpack.c.l.b16 %v299
        %v378 = vunpack.c.l.b16 %v300
        %v379 = vunpack.c.l.b16 %v301
        %v380 = vunpack.c.l.b16 %v302
        %v381 = vunpack.c.l.b16 %v303
        %v382 = vunpack.c.l.b16 %v304
        %v383 = vunpack.c.l.b16 %v305
        %v384 = vunpack.c.l.b16 %v306
        %v385 = vunpack.c.l.b16 %v307
        %v386 = vunpack.c.l.b16 %v308
        %v387 = vunpack.c.l.b16 %v309
        %v388 = vunpack.c.l.b16 %v310
        %v389 = vunpack.c.l.b16 %v311
        %v390 = vunpack.c.l.b16 %v312
        %v391 = vunpack.c.l.b16 %v313
        %v392 = vunpack.c.l.b16 %v314
        %v393 = vunpack.c.l.b16 %v315
        %v394 = vpack.c.b16 %v363, %v362
        %v395 = vpack.c.b16 %v365, %v364
        %v396 = vpack.c.b16 %v367, %v366
        %v397 = vpack.c.b16 %v369, %v368
        %v398 = vpack.c.b16 %v371, %v370
        %v399 = vpack.c.b16 %v373, %v372
        %v400 = vpack.c.b16 %v375, %v374
        %v401 = vpack.c.b16 %v377, %v376
        %v402 = vpack.c.b16 %v379, %v378
        %v403 = vpack.c.b16 %v381, %v380
        %v404 = vpack.c.b16 %v383, %v382
        %v405 = vpack.c.b16 %v385, %v384
        %v406 = vpack.c.b16 %v387, %v386
        %v407 = vpack.c.b16 %v389, %v388
        %v408 = vpack.c.b16 %v391, %v390
        %v409 = vpack.c.b16 %v393, %v392
        %426 = vmatpush.bf16.msra.mxu0 %v401
        %427 = vmatpush.bf16.msra.mxu0 %v400
        %428 = vmatpush.bf16.msra.mxu0 %v399
        %429 = vmatpush.bf16.msra.mxu0 %v398
        %430 = vmatpush.bf16.msra.mxu0 %v397
        %431 = vmatpush.bf16.msra.mxu0 %v396
        %432 = vmatpush.bf16.msra.mxu0 %v395
        %433 = vmatpush.bf16.msra.mxu0 %v394
        %434 = vmatmul.bf16.gmra.mxu0 %v326
        %v435 = vpop.f32.mrf.mxu0
        %v436 = vadd.f32 %v318, %v435
        %v437 = vpop.f32.mrf.mxu0
        %v438 = vadd.f32 %v318, %v437
        %439 = vdwg.mxu0
        %440 = vmatpush.bf16.msra.mxu0 %v409
        %441 = vmatpush.bf16.msra.mxu0 %v408
        %442 = vmatpush.bf16.msra.mxu0 %v407
        %443 = vmatpush.bf16.msra.mxu0 %v406
        %444 = vmatpush.bf16.msra.mxu0 %v405
        %445 = vmatpush.bf16.msra.mxu0 %v404
        %446 = vmatpush.bf16.msra.mxu0 %v403
        %447 = vmatpush.bf16.msra.mxu0 %v402
        %448 = vmatmul.bf16.gmra.mxu0 %v327
        %v449 = vpop.f32.mrf.mxu0
        %v450 = vadd.f32 %v436, %v449
        %v451 = vpop.f32.mrf.mxu0
        %v452 = vadd.f32 %v438, %v451
        %453 = vdwg.mxu0
        %v454 = vtanh.pop %v450
        %v455 = vtanh.pop %v452
        %456 = vst [vmem:[%s277] sm:$0xff] %v454
        %457 = vst [vmem:[%s277 + $0x8] sm:$0xff] %v455
        %s458 = sand.u32 %s132, 1
        %s459 = scalar_lea.sflag [#allocation4], %s458
        %s460 = sand.u32 %s132, 1
        %s461 = smul.addr %s460, 16
        %s462 = scalar_lea.vmem [#allocation8], %s461
        // Predicated region
        $region45: #{tpu_custom_call.1} parent=31 // pred_check
          %p463 = pneg %p142
        $region46: #{tpu_custom_call.1} parent=31 // pred_check_branch
          %465 = sbr.rel (%p463) target = $region48
        $region47: #{tpu_custom_call.1} parent=31 // pred_region
          %s466 = smul.u32 2, %s27
          %468 = vsyncadd %s459, 0
          %s469 = smul.addr %s466, 2
          %s470 = sadd.s32 %s26, %s469
          %s471 = smul.addr %s470, 8
          %s472 = scalar_lea.hbm %s3, %s471
          %s473 = sshll.u32 %s462, 4
          %s474 = int_to_ptr.vmem [resolvable:$true] %s473
          %s475 = sshll.u32 %s472, 4
          %s476 = int_to_ptr.hbm [resolvable:$true] %s475
          %481 = dma.vmem_to_hbm [thread:$0]  %s474, 256, %s476, %s459, 128, 256, 8
        $region48: #{tpu_custom_call.1} parent=31 // pred_fallthru
          _
      $region32: #{tpu_custom_call.1} parent=5 // pred_fallthru
        _
      %p482 = scmp.le.s32.totalorder 2, %s16
      // Predicated region
      $region49: #{tpu_custom_call.1} parent=5 // pred_check
        %p483 = pneg %p482
      $region50: #{tpu_custom_call.1} parent=5 // pred_check_branch
        %485 = sbr.rel (%p483) target = $region52
      $region51: #{tpu_custom_call.1} parent=5 // pred_region
        %s486 = ssub.s32 %s16, 2
        // Predicated region
        $region53: #{tpu_custom_call.1} parent=51 // pred_check
          %p487 = pneg %p148
        $region54: #{tpu_custom_call.1} parent=51 // pred_check_branch
          %489 = sbr.rel (%p487) target = $region56
        $region55: #{tpu_custom_call.1} parent=51 // pred_region
          %s490 = sand.u32 %s133, 1
          %s491 = scalar_lea.sflag [#allocation4], %s490
          %s492 = sand.u32 %s133, 1
          %s493 = smul.addr %s492, 16
          %s494 = scalar_lea.vmem [#allocation8], %s493
          %496 = dma.done %s491, 256
        $region56: #{tpu_custom_call.1} parent=51 // pred_fallthru
          _
      $region52: #{tpu_custom_call.1} parent=5 // pred_fallthru
        _
    $region6: #{tpu_custom_call.1} parent=1 // loop_footer
      %s20 = sadd.s32 1, %s16
    $region7: #{tpu_custom_call.1} parent=1 // loop_footer_branch
      %15 = sbr.rel target = $region3
    $region8: #{tpu_custom_call.1} parent=1 // loop_exit
      _
    %497 = vsyncpa [#allocation3], 1
    %s498 = scalar_lea.sflag [#allocation3], 1
    %499 = vsyncpa %s498, 1
    %500 = vsyncpa [#allocation6], 1
    %s501 = scalar_lea.sflag [#allocation6], 1
    %502 = vsyncpa %s501, 1
    %503 = vsyncpa [#allocation4], 1
    %s504 = scalar_lea.sflag [#allocation4], 1
    %505 = vsyncpa %s504, 1

</llo_original>
